<compile_context>
chip_gen: v6e
topology: v6e:2x2x1
jax: 0.10.0
libtpu: 0.0.40
codegen_flags: <defaults>
</compile_context>

<pallas_src>
import functools

import jax
import jax.numpy as jnp
from jax.experimental import pallas as pl
from jax.experimental.pallas import tpu as pltpu


def cse_kernel(u_ref, wsq_t_ref, wex_t_ref, out_ref, *, inv_hw):
    """Fused cSE for a tile of TB images.

    u_ref:     (TB, C, HW)  activations (native dtype); channels=sublanes, spatial=lanes
    wsq_t_ref: (C, Cr)      Conv_Squeeze.weight[:, :, 0, 0].T
    wex_t_ref: (Cr, C)      Conv_Excitation.weight[:, :, 0, 0].T
    out_ref:   (TB, C, HW)  same dtype as input
    """
    u = u_ref[...]                                             # (TB, C, HW), native dtype

    # Spatial pools -> (TB, C), accumulated in f32.  Because both 1x1 convs are
    # bias-free (linear) and there is no nonlinearity between them, the two
    # squeeze/excite paths collapse onto the *sum* of the pooled vectors.
    # TODO(synk): fuse sum+max into a single lane-chunk pass (minor: kernel is HBM-bound).
    pooled = (jnp.sum(u.astype(jnp.float32), axis=2) * inv_hw
              + jnp.max(u, axis=2).astype(jnp.float32))        # (TB, C) f32

    # 1x1 convs at 1x1 spatial are plain matmuls, batched over the TB rows.
    s = jnp.dot(pooled, wsq_t_ref[...].astype(jnp.float32),
                preferred_element_type=jnp.float32)            # (TB, Cr)
    e = jnp.dot(s, wex_t_ref[...].astype(jnp.float32),
                preferred_element_type=jnp.float32)            # (TB, C)

    # Sigmoid gate (f32 math), then rescale & store in the activation dtype.
    z = (1.0 / (1.0 + jnp.exp(-e))).astype(u.dtype)            # (TB, C)
    out_ref[...] = u * z[:, :, None]                           # sublane broadcast multiply


def _choose_tb(batch, per_image_bytes, target_bytes=2 << 20):
    """Largest divisor of `batch` whose block stays <= ~target_bytes while
    keeping at least 2 grid steps when batch > 1 (pipeline overlap / 2nd TC)."""
    tb = 1
    for cand in range(2, batch + 1):
        if batch % cand:
            continue
        if cand * per_image_bytes > target_bytes:
            break
        if batch // cand < 2:
            break
        tb = cand
    return tb


def cse_forward(u_nchw, w_sq, w_ex):
    """Pallas implementation of cSE.forward.  Input/output are NCHW, dtype preserved."""
    B, C, H, W = u_nchw.shape
    Cr = w_sq.shape[0]
    HW = H * W
    dtype = u_nchw.dtype
    itemsize = jnp.dtype(dtype).itemsize

    u = u_nchw.reshape(B, C, HW)          # contiguous reshape, no copy, native dtype
    wsq_t = w_sq.T                        # (C, Cr): pooled @ wsq_t
    wex_t = w_ex.T                        # (Cr, C): squeezed @ wex_t

    TB = _choose_tb(B, C * HW * itemsize)
    grid = (B // TB,)

    block_bytes = TB * C * HW * itemsize
    w_bytes = 2 * C * Cr * jnp.dtype(w_sq.dtype).itemsize
    # in + out double-buffered (4x block) + resident weights + margin; cap for v7x (64 MiB/TC).
    vmem_limit = int(min(max(4 * block_bytes + 2 * w_bytes + (4 << 20), 32 << 20), 48 << 20))

    out = pl.pallas_call(
        functools.partial(cse_kernel, inv_hw=1.0 / HW),
        out_shape=jax.ShapeDtypeStruct((B, C, HW), dtype),
        grid=grid,
        in_specs=[
            pl.BlockSpec((TB, C, HW), lambda b: (b, 0, 0)),
            pl.BlockSpec((C, Cr), lambda b: (0, 0)),    # weights resident across steps
            pl.BlockSpec((Cr, C), lambda b: (0, 0)),
        ],
        out_specs=pl.BlockSpec((TB, C, HW), lambda b: (b, 0, 0)),
        input_output_aliases={0: 0},                    # result reuses U's HBM buffer
        compiler_params=pltpu.CompilerParams(
            dimension_semantics=("parallel",),
            vmem_limit_bytes=vmem_limit,
        ),
    )(u, wsq_t, wex_t)
    return out.reshape(B, C, H, W)


def reference_forward(u, w_sq, w_ex):
    """Pure-JAX NCHW mirror of the PyTorch module (f32 math), for checking."""
    uf = u.astype(jnp.float32)
    z1 = jnp.mean(uf, axis=(2, 3))            # AdaptiveAvgPool2d(1)
    z2 = jnp.max(uf, axis=(2, 3))             # AdaptiveMaxPool2d(1)

    def squeeze_excite(z):                    # 1x1 convs on (B,C,1,1) == matmuls
        return (z @ w_sq.T) @ w_ex.T

    z = jax.nn.sigmoid(squeeze_excite(z1) + squeeze_excite(z2))
    return uf * z[:, :, None, None]


if __name__ == "__main__":
    # in_channels must be >= 16 so that in_channels // 16 >= 1 (module spec).
    B, C, H, W = 2, 32, 16, 16
    Cr = C // 16

    key = jax.random.PRNGKey(0)
    ku, ksq, kex = jax.random.split(key, 3)
    u = jax.random.normal(ku, (B, C, H, W), jnp.float32)          # NCHW like torch
    w_sq = 0.3 * jax.random.normal(ksq, (Cr, C), jnp.float32)     # Conv_Squeeze.weight[:, :, 0, 0]
    w_ex = 0.3 * jax.random.normal(kex, (C, Cr), jnp.float32)     # Conv_Excitation.weight[:, :, 0, 0]

    fwd = jax.jit(cse_forward)

    # float32 path
    out = jax.block_until_ready(fwd(u, w_sq, w_ex))
    ref = reference_forward(u, w_sq, w_ex)
    assert out.shape == (B, C, H, W), out.shape
    assert out.dtype == u.dtype, out.dtype
    assert jnp.allclose(out, ref, rtol=1e-5, atol=1e-5), \
        float(jnp.max(jnp.abs(out - ref)))

    # bf16 path: I/O stays bf16 (no forced f32 round trip), gate math in f32.
    u16 = u.astype(jnp.bfloat16)
    out16 = jax.block_until_ready(fwd(u16, w_sq, w_ex))
    ref16 = reference_forward(u16, w_sq, w_ex)
    assert out16.dtype == jnp.bfloat16, out16.dtype
    assert jnp.allclose(out16.astype(jnp.float32), ref16, rtol=5e-2, atol=5e-2), \
        float(jnp.max(jnp.abs(out16.astype(jnp.float32) - ref16)))

    print("KERNEL_OK")
</pallas_src>

<mosaic_0001>
module attributes {stable_mosaic.version = 11 : i64} {
  func.func @cse_kernel(%arg0: i32, %arg1: memref<1x32x256xf32, #tpu.memory_space<vmem>>, %arg2: memref<32x2xf32, #tpu.memory_space<vmem>>, %arg3: memref<2x32xf32, #tpu.memory_space<vmem>>, %arg4: memref<1x32x256xf32, #tpu.memory_space<vmem>>) attributes {dimension_semantics = [#tpu.dimension_semantics<parallel>], iteration_bounds = array<i64: 2>, scalar_prefetch = 0 : i64, scratch_operands = 0 : i64, tpu.core_type = #tpu.core_type<tc>, window_params = [{transform_indices = @transform_0, window_bounds = array<i64: 1, 32, 256>}, {pipeline_mode = #tpu.pipeline_mode<synchronous>, transform_indices = @transform_1, window_bounds = array<i64: 32, 2>}, {pipeline_mode = #tpu.pipeline_mode<synchronous>, transform_indices = @transform_2, window_bounds = array<i64: 2, 32>}, {transform_indices = @transform_3, window_bounds = array<i64: 1, 32, 256>}]} {
    %c0 = arith.constant 0 : index
    %c0_0 = arith.constant 0 : index
    %c0_1 = arith.constant 0 : index
    %0 = vector.load %arg1[%c0, %c0_0, %c0_1] : memref<1x32x256xf32, #tpu.memory_space<vmem>>, vector<1x32x256xf32>
    %cst = arith.constant dense<0.000000e+00> : vector<1x32xf32>
    %1 = vector.multi_reduction <add>, %0, %cst [2] : vector<1x32x256xf32> to vector<1x32xf32>
    %cst_2 = arith.constant 3.906250e-03 : f32
    %2 = vector.broadcast %cst_2 : f32 to vector<1x32xf32>
    %3 = arith.mulf %1, %2 : vector<1x32xf32>
    %cst_3 = arith.constant dense<0xFF800000> : vector<1x32xf32>
    %4 = vector.multi_reduction <maximumf>, %0, %cst_3 [2] : vector<1x32x256xf32> to vector<1x32xf32>
    %5 = arith.addf %3, %4 : vector<1x32xf32>
    %c0_4 = arith.constant 0 : index
    %c0_5 = arith.constant 0 : index
    %6 = vector.load %arg2[%c0_4, %c0_5] : memref<32x2xf32, #tpu.memory_space<vmem>>, vector<32x2xf32>
    %cst_6 = arith.constant dense<0.000000e+00> : vector<1x2xf32>
    %7 = tpu.matmul %5, %6, %cst_6 {dimension_numbers = #tpu.dot_dimension_numbers<[1], [0], [0], [1], [0, 0, 1, 1], [], []>} : vector<1x32xf32>, vector<32x2xf32>, vector<1x2xf32> -> vector<1x2xf32>
    %c0_7 = arith.constant 0 : index
    %c0_8 = arith.constant 0 : index
    %8 = vector.load %arg3[%c0_7, %c0_8] : memref<2x32xf32, #tpu.memory_space<vmem>>, vector<2x32xf32>
    %cst_9 = arith.constant dense<0.000000e+00> : vector<1x32xf32>
    %9 = tpu.matmul %7, %8, %cst_9 {dimension_numbers = #tpu.dot_dimension_numbers<[1], [0], [0], [1], [0, 0, 1, 1], [], []>} : vector<1x2xf32>, vector<2x32xf32>, vector<1x32xf32> -> vector<1x32xf32>
    %cst_10 = arith.constant 0.000000e+00 : f32
    %10 = vector.broadcast %cst_10 : f32 to vector<1x32xf32>
    %11 = arith.subf %10, %9 : vector<1x32xf32>
    %12 = math.exp %11 : vector<1x32xf32>
    %cst_11 = arith.constant 1.000000e+00 : f32
    %13 = vector.broadcast %cst_11 : f32 to vector<1x32xf32>
    %14 = arith.addf %13, %12 : vector<1x32xf32>
    %cst_12 = arith.constant 1.000000e+00 : f32
    %15 = vector.broadcast %cst_12 : f32 to vector<1x32xf32>
    %16 = arith.divf %15, %14 : vector<1x32xf32>
    %17 = vector.shape_cast %16 : vector<1x32xf32> to vector<1x32x1xf32>
    %18 = vector.broadcast %17 : vector<1x32x1xf32> to vector<1x32x256xf32>
    %19 = arith.mulf %0, %18 : vector<1x32x256xf32>
    %c0_13 = arith.constant 0 : index
    %c0_14 = arith.constant 0 : index
    %c0_15 = arith.constant 0 : index
    %20 = vector.load %arg4[%c0_13, %c0_14, %c0_15] : memref<1x32x256xf32, #tpu.memory_space<vmem>>, vector<1x32x256xf32>
    tpu.vector_store %arg4[%c0_13, %c0_14, %c0_15], %19 {strides = array<i32>} : memref<1x32x256xf32, #tpu.memory_space<vmem>>, vector<1x32x256xf32>,
    return
  }
  func.func @transform_0(%arg0: i32) -> (i32, i32, i32) {
    %c0_i32 = arith.constant 0 : i32
    %c0_i32_0 = arith.constant 0 : i32
    %c0_i32_1 = arith.constant 0 : i32
    return %arg0, %c0_i32, %c0_i32_0 : i32, i32, i32
  }
  func.func @transform_1(%arg0: i32) -> (i32, i32) {
    %c0_i32 = arith.constant 0 : i32
    %c0_i32_0 = arith.constant 0 : i32
    %c0_i32_1 = arith.constant 0 : i32
    return %c0_i32, %c0_i32_0 : i32, i32
  }
  func.func @transform_2(%arg0: i32) -> (i32, i32) {
    %c0_i32 = arith.constant 0 : i32
    %c0_i32_0 = arith.constant 0 : i32
    %c0_i32_1 = arith.constant 0 : i32
    return %c0_i32, %c0_i32_0 : i32, i32
  }
  func.func @transform_3(%arg0: i32) -> (i32, i32, i32) {
    %c0_i32 = arith.constant 0 : i32
    %c0_i32_0 = arith.constant 0 : i32
    %c0_i32_1 = arith.constant 0 : i32
    return %arg0, %c0_i32, %c0_i32_0 : i32, i32, i32
  }
}

</mosaic_0001>

<llo_original>
// kernel: cse_forward.1
$region0: #{cse_forward.1}
  #allocation0 [shape = 'u32[]', space=smem, size = 0x4, offset = 0x4, fixed_abs, tag = 'smem constant byte address 0x4 - core index']
  #allocation1 [shape = 'u32[144,128]{1,0:T(1,128)}', space=vmem, size = 0x12000, scoped, tag = 'internal scratch']
  %s0 = inlined_call_operand.vmem [shape: f32[2,32,256], index: 0, kind: input, shape index: {}, may-alias: {0,3}]
  %s1 = inlined_call_operand.vmem [shape: f32[32,2], index: 1, kind: input, shape index: {}]
  %s2 = inlined_call_operand.vmem [shape: f32[2,32], index: 2, kind: input, shape index: {}]
  %s3 = inlined_call_operand.vmem [shape: f32[2,32,256], index: 3, kind: output, shape index: {}, may-alias: {0,3}]
  %s4 = sld [smem:[#allocation0]]
  $region45: #{cse_forward.1} parent=0
    _
  %s6 = ssub.s32 1, %s4
  %s7 = scalar_select 0, %s6, %s4
  loop: start=0, step=1, limit=4
  $region2: #{cse_forward.1} parent=0 // loop_pre_header
    _
  $region3: #{cse_forward.1} parent=0 // loop_header
    %s9 = sphi 0, %s13
    %p10 = scmp.ge.s32.totalorder %s9, 4
    %s19 = sphi 0, %s21
    %s22 = sphi 0, %s19
    %s23 = sphi 0, %s22
    %s39 = sphi 0, %s23
    %s43 = sphi 0, %s43
    %s45 = sphi 0, %s43
    %s46 = sphi 0, %s45
    %s60 = sphi 0, %s46
    %s64 = sphi 0, %s64
    %s66 = sphi 0, %s64
    %s67 = sphi 0, %s66
    %s81 = sphi 0, %s67
    %s87 = sphi 0, %s89
    %s90 = sphi 0, %s87
    %s91 = sphi 0, %s90
    %s107 = sphi 0, %s91
  $region4: #{cse_forward.1} parent=0 // loop_header_branch
    %12 = sbr.rel (%p10) target = $region8
  $region5: #{cse_forward.1} parent=0 // loop_body
    %s14 = ssub.s32 %s9, 1
    %s15 = ssub.s32 %s9, 2
    %s16 = sadd.s32 %s9, 1
    %s17 = ssub.s32 %s9, %s16
    %p18 = scmp.eq.s32.totalorder %s17, 0
    %s20 = sadd.s32 %s19, 1
    %s21 = scalar_select %p18, %s19, %s20
    %p24 = pneg %p18
    %p25 = scmp.eq.s32.totalorder %s9, 1
    %p26 = por %p24, %p25
    %p27 = scmp.ne.s32.totalorder %s19, %s22
    %p28 = scmp.eq.s32.totalorder %s9, 0
    %p29 = por %p27, %p28
    %p30 = scmp.ne.s32.totalorder %s19, %s22
    %p31 = scmp.eq.s32.totalorder %s14, 1
    %p32 = por %p30, %p31
    %p33 = scmp.ne.s32.totalorder %s22, %s23
    %p34 = scmp.eq.s32.totalorder %s14, 0
    %p35 = por %p33, %p34
    %p36 = scmp.ne.s32.totalorder %s22, %s23
    %p37 = scmp.eq.s32.totalorder %s15, 1
    %p38 = por %p36, %p37
    %p40 = scmp.ne.s32.totalorder %s23, %s39
    %p41 = scmp.eq.s32.totalorder %s15, 0
    %p42 = por %p40, %p41
    %s44 = sadd.s32 %s43, 1
    %p47 = scmp.eq.s32.totalorder %s9, 1
    %p48 = scmp.ne.s32.totalorder %s43, %s45
    %p49 = scmp.eq.s32.totalorder %s9, 0
    %p50 = por %p48, %p49
    %p51 = scmp.ne.s32.totalorder %s43, %s45
    %p52 = scmp.eq.s32.totalorder %s14, 1
    %p53 = por %p51, %p52
    %p54 = scmp.ne.s32.totalorder %s45, %s46
    %p55 = scmp.eq.s32.totalorder %s14, 0
    %p56 = por %p54, %p55
    %p57 = scmp.ne.s32.totalorder %s45, %s46
    %p58 = scmp.eq.s32.totalorder %s15, 1
    %p59 = por %p57, %p58
    %p61 = scmp.ne.s32.totalorder %s46, %s60
    %p62 = scmp.eq.s32.totalorder %s15, 0
    %p63 = por %p61, %p62
    %s65 = sadd.s32 %s64, 1
    %p68 = scmp.eq.s32.totalorder %s9, 1
    %p69 = scmp.ne.s32.totalorder %s64, %s66
    %p70 = scmp.eq.s32.totalorder %s9, 0
    %p71 = por %p69, %p70
    %p72 = scmp.ne.s32.totalorder %s64, %s66
    %p73 = scmp.eq.s32.totalorder %s14, 1
    %p74 = por %p72, %p73
    %p75 = scmp.ne.s32.totalorder %s66, %s67
    %p76 = scmp.eq.s32.totalorder %s14, 0
    %p77 = por %p75, %p76
    %p78 = scmp.ne.s32.totalorder %s66, %s67
    %p79 = scmp.eq.s32.totalorder %s15, 1
    %p80 = por %p78, %p79
    %p82 = scmp.ne.s32.totalorder %s67, %s81
    %p83 = scmp.eq.s32.totalorder %s15, 0
    %p84 = por %p82, %p83
    %s85 = ssub.s32 %s9, %s16
    %p86 = scmp.eq.s32.totalorder %s85, 0
    %s88 = sadd.s32 %s87, 1
    %s89 = scalar_select %p86, %s87, %s88
    %p92 = pneg %p86
    %p93 = scmp.eq.s32.totalorder %s9, 1
    %p94 = por %p92, %p93
    %p95 = scmp.ne.s32.totalorder %s87, %s90
    %p96 = scmp.eq.s32.totalorder %s9, 0
    %p97 = por %p95, %p96
    %p98 = scmp.ne.s32.totalorder %s87, %s90
    %p99 = scmp.eq.s32.totalorder %s14, 1
    %p100 = por %p98, %p99
    %p101 = scmp.ne.s32.totalorder %s90, %s91
    %p102 = scmp.eq.s32.totalorder %s14, 0
    %p103 = por %p101, %p102
    %p104 = scmp.ne.s32.totalorder %s90, %s91
    %p105 = scmp.eq.s32.totalorder %s15, 1
    %p106 = por %p104, %p105
    %p108 = scmp.ne.s32.totalorder %s91, %s107
    %p109 = scmp.eq.s32.totalorder %s15, 0
    %p110 = por %p108, %p109
    %p111 = scmp.le.s32.totalorder 1, %s9
    %p112 = scmp.lt.s32.totalorder %s9, 3
    %p113 = pnand %p111, %p112
    %p114 = pneg %p113
    // Predicated region
    $region9: #{cse_forward.1} parent=5 // pred_check
      _
    $region10: #{cse_forward.1} parent=5 // pred_check_branch
      %116 = sbr.rel (%p113) target = $region12
    $region11: #{cse_forward.1} parent=5 // pred_region
      %s117 = ssub.s32 %s9, 1
      // Predicated region
      $region13: #{cse_forward.1} parent=11 // pred_check
        %p118 = pneg %p56
      $region14: #{cse_forward.1} parent=11 // pred_check_branch
        %120 = sbr.rel (%p118) target = $region16
      $region15: #{cse_forward.1} parent=11 // pred_region
        _
      $region16: #{cse_forward.1} parent=11 // pred_fallthru
        _
      // Predicated region
      $region17: #{cse_forward.1} parent=11 // pred_check
        %p121 = pneg %p77
      $region18: #{cse_forward.1} parent=11 // pred_check_branch
        %123 = sbr.rel (%p121) target = $region20
      $region19: #{cse_forward.1} parent=11 // pred_region
        _
      $region20: #{cse_forward.1} parent=11 // pred_fallthru
        _
    $region12: #{cse_forward.1} parent=5 // pred_fallthru
      _
    %p124 = scmp.lt.s32.totalorder %s9, 2
    // Predicated region
    $region21: #{cse_forward.1} parent=5 // pred_check
      %p125 = pneg %p124
    $region22: #{cse_forward.1} parent=5 // pred_check_branch
      %127 = sbr.rel (%p125) target = $region24
    $region23: #{cse_forward.1} parent=5 // pred_region
      // Predicated region
      $region25: #{cse_forward.1} parent=23 // pred_check
        %p128 = pneg %p29
      $region26: #{cse_forward.1} parent=23 // pred_check_branch
        %130 = sbr.rel (%p128) target = $region28
      $region27: #{cse_forward.1} parent=23 // pred_region
        %p131 = scmp.lt.s32.totalorder %s9, 1
        %s132 = scalar_select %p131, %s9, 1
        %s133 = smul.addr %s132, 8
        %s134 = smul.addr %s133, 8
        %s135 = scalar_lea.vmem %s0, %s134
      $region28: #{cse_forward.1} parent=23 // pred_fallthru
        _
    $region24: #{cse_forward.1} parent=5 // pred_fallthru
      _
    %p136 = scmp.le.s32.totalorder 1, %s9
    %p137 = scmp.lt.s32.totalorder %s9, 3
    %p138 = pnand %p136, %p137
    %p139 = pneg %p138
    // Predicated region
    $region29: #{cse_forward.1} parent=5 // pred_check
      _
    $region30: #{cse_forward.1} parent=5 // pred_check_branch
      %141 = sbr.rel (%p138) target = $region32
    $region31: #{cse_forward.1} parent=5 // pred_region
      %s142 = ssub.s32 %s9, 1
      %p143 = scmp.lt.s32.totalorder %s14, 1
      %s144 = scalar_select %p143, %s14, 1
      %s145 = smul.addr %s144, 8
      %s146 = smul.addr %s145, 8
      %s147 = scalar_lea.vmem %s0, %s146
      %p148 = pneg %p35
      %p149 = pneg %p32
      %p150 = pneg %p56
      %p151 = pneg %p53
      %p152 = pneg %p77
      %p153 = pneg %p74
      %p154 = pneg %p103
      %p155 = pneg %p100
      %p156 = scmp.lt.s32.totalorder %s14, 1
      %s157 = scalar_select %p156, %s14, 1
      %s158 = smul.addr %s157, 8
      %s159 = smul.addr %s158, 8
      %s160 = scalar_lea.vmem %s3, %s159
      %p161 = scmp.lt.s32.totalorder %s14, 1
      %s162 = scalar_select %p161, %s14, 1
      %s163 = smul.addr %s162, 8
      %s164 = smul.addr %s163, 8
      %s165 = scalar_lea.vmem %s0, %s164
      %p166 = scmp.lt.s32.totalorder %s14, 1
      %s167 = scalar_select %p166, %s14, 1
      %s168 = smul.addr %s167, 8
      %s169 = smul.addr %s168, 8
      %s170 = scalar_lea.vmem %s3, %s169
      %v171 = vld [vmem:[%s165] sm:$0xff]
      %v172 = vld [vmem:[%s165 + $0x8] sm:$0xff]
      %v173 = vld [vmem:[%s165 + $0x10] sm:$0xff]
      %v174 = vld [vmem:[%s165 + $0x18] sm:$0xff]
      %v175 = vld [vmem:[%s165 + $0x20] sm:$0xff]
      %v176 = vld [vmem:[%s165 + $0x28] sm:$0xff]
      %v177 = vld [vmem:[%s165 + $0x30] sm:$0xff]
      %v178 = vld [vmem:[%s165 + $0x38] sm:$0xff]
      %v179 = vadd.f32 %v171, %v172
      %180 = vadd.xlane.f32.xlu0 %v179
      %v181 = vpop.xlane.xlu0 %180
      %v182 = vadd.f32 %v173, %v174
      %183 = vadd.xlane.f32.xlu0 %v182
      %v184 = vpop.xlane.xlu0 %183
      %v185 = vadd.f32 %v175, %v176
      %186 = vadd.xlane.f32.xlu0 %v185
      %v187 = vpop.xlane.xlu0 %186
      %v188 = vadd.f32 %v177, %v178
      %189 = vadd.xlane.f32.xlu0 %v188
      %v190 = vpop.xlane.xlu0 %189
      %v191 = vmul.f32 %v181, 0.00390625
      %v192 = vmul.f32 %v184, 0.00390625
      %v193 = vmul.f32 %v187, 0.00390625
      %v194 = vmul.f32 %v190, 0.00390625
      %v195 = vmax.f32 %v171, %v172
      %196 = vmax.xlane.f32.xlu0 %v195
      %v197 = vpop.xlane.xlu0 %196
      %v198 = vmax.f32 %v173, %v174
      %199 = vmax.xlane.f32.xlu0 %v198
      %v200 = vpop.xlane.xlu0 %199
      %v201 = vmax.f32 %v175, %v176
      %202 = vmax.xlane.f32.xlu0 %v201
      %v203 = vpop.xlane.xlu0 %202
      %v204 = vmax.f32 %v177, %v178
      %205 = vmax.xlane.f32.xlu0 %v204
      %v206 = vpop.xlane.xlu0 %205
      %v207 = vadd.f32 %v191, %v197
      %v208 = vadd.f32 %v192, %v200
      %v209 = vadd.f32 %v193, %v203
      %v210 = vadd.f32 %v194, %v206
      %v211 = vld [vmem:[%s1] sm:$0xff]
      %v212 = vld [vmem:[%s1 + $0x8] sm:$0xff]
      %v213 = vld [vmem:[%s1 + $0x10] sm:$0xff]
      %v214 = vld [vmem:[%s1 + $0x18] sm:$0xff]
      %v219 = vlaneseq
      %v220 = vand.u32 %v219, 127
      %v221 = vlaneseq
      %v222 = vshrl.u32 %v221, 7
      %v223 = vsub.s32 %v220, %v222
      %v224 = vrot.slane %v207, %v223
      %v225 = vadd.s32 %v220, 4294967288
      %v226 = vlaneseq
      %v227 = vshrl.u32 %v226, 7
      %v228 = vsub.s32 %v225, %v227
      %v229 = vrot.slane %v208, %v228
      %vm230 = vcmask 130112
      %v231 = vsel %vm230, %v229, %v224
      %v232 = vadd.s32 %v220, 4294967280
      %v233 = vlaneseq
      %v234 = vshrl.u32 %v233, 7
      %v235 = vsub.s32 %v232, %v234
      %v236 = vrot.slane %v209, %v235
      %vm237 = vcmask 195712
      %v238 = vsel %vm237, %v236, %v231
      %v239 = vadd.s32 %v220, 4294967272
      %v240 = vlaneseq
      %v241 = vshrl.u32 %v240, 7
      %v242 = vsub.s32 %v239, %v241
      %v243 = vrot.slane %v210, %v242
      %vm244 = vcmask 261312
      %v245 = vsel %vm244, %v243, %v238
      %vm246 = vcmask 261120
      %v247 = vsel %vm246, %v245, 0
      %249 = vmatprep.subr.mxu0 0.0
      %250 = vmatpush1.msra.mxu0 0.0
      %251 = vmatprep.subr.mxu0 0.0
      %252 = vmatpush1.msra.mxu0 0.0
      %253 = vmatprep.subr.mxu0 0.0
      %254 = vmatpush1.msra.mxu0 0.0
      %255 = vmatprep.subr.mxu0 0.0
      %256 = vmatpush1.msra.mxu0 0.0
      %257 = vmatprep.subr.mxu0 0.0
      %258 = vmatpush1.msra.mxu0 0.0
      %259 = vmatprep.subr.mxu0 0.0
      %260 = vmatpush1.msra.mxu0 0.0
      %261 = vmatprep.subr.mxu0 0.0
      %262 = vmatpush1.msra.mxu0 0.0
      %263 = vmatprep.subr.mxu0 0.0
      %264 = vmatpush1.msra.mxu0 0.0
      %265 = vmatprep.subr.mxu0 0.0
      %266 = vmatpush1.msra.mxu0 0.0
      %267 = vmatprep.subr.mxu0 0.0
      %268 = vmatpush1.msra.mxu0 0.0
      %269 = vmatprep.subr.mxu0 0.0
      %270 = vmatpush1.msra.mxu0 0.0
      %271 = vmatprep.subr.mxu0 0.0
      %272 = vmatpush1.msra.mxu0 0.0
      %273 = vmatprep.subr.mxu0 0.0
      %274 = vmatpush1.msra.mxu0 %v214
      %275 = vmatprep.subr.mxu0 0.0
      %276 = vmatpush1.msra.mxu0 %v213
      %277 = vmatprep.subr.mxu0 0.0
      %278 = vmatpush1.msra.mxu0 %v212
      %279 = vmatprep.subr.mxu0 0.0
      %280 = vmatpush1.msra.mxu0 %v211
      %281 = vmatprep.subr.mxu0 0.0
      %282 = vmatpush2.msra.mxu0 0.0
      %283 = vmatprep.subr.mxu0 0.0
      %284 = vmatpush2.msra.mxu0 0.0
      %285 = vmatprep.subr.mxu0 0.0
      %286 = vmatpush2.msra.mxu0 0.0
      %287 = vmatprep.subr.mxu0 0.0
      %288 = vmatpush2.msra.mxu0 0.0
      %289 = vmatprep.subr.mxu0 0.0
      %290 = vmatpush2.msra.mxu0 0.0
      %291 = vmatprep.subr.mxu0 0.0
      %292 = vmatpush2.msra.mxu0 0.0
      %293 = vmatprep.subr.mxu0 0.0
      %294 = vmatpush2.msra.mxu0 0.0
      %295 = vmatprep.subr.mxu0 0.0
      %296 = vmatpush2.msra.mxu0 0.0
      %297 = vmatprep.subr.mxu0 0.0
      %298 = vmatpush2.msra.mxu0 0.0
      %299 = vmatprep.subr.mxu0 0.0
      %300 = vmatpush2.msra.mxu0 0.0
      %301 = vmatprep.subr.mxu0 0.0
      %302 = vmatpush2.msra.mxu0 0.0
      %303 = vmatprep.subr.mxu0 0.0
      %304 = vmatpush2.msra.mxu0 0.0
      %305 = vmatprep.subr.mxu0 0.0
      %306 = vmatpush2.msra.mxu0 0.0
      %307 = vmatprep.subr.mxu0 0.0
      %308 = vmatpush2.msra.mxu0 0.0
      %309 = vmatprep.subr.mxu0 0.0
      %310 = vmatpush2.msra.mxu0 0.0
      %311 = vmatprep.subr.mxu0 0.0
      %312 = vmatpush2.msra.mxu0 0.0
      %313 = vmatprep.mubr.f32.mxu0 0.0
      %314 = vmatmul.mubr.f32.gmra.mxu0 %v247
      %v315 = vpop.f32.mrf.mxu0
      %v316 = vadd.f32 0.0, %v315
      %v317 = vpop.f32.mrf.mxu0
      %318 = vdwg.mxu0
      %v319 = vld [vmem:[%s2] sm:$0x3]
      %vm320 = vcmask 15360
      %v322 = vsel %vm320, %v316, 0
      %vm324 = vcmask 1041408
      %v326 = vsel %vm324, %v319, 0
      %328 = vmatprep.subr.mxu0 0.0
      %329 = vmatpush1.msra.mxu0 0.0
      %330 = vmatprep.subr.mxu0 0.0
      %331 = vmatpush1.msra.mxu0 0.0
      %332 = vmatprep.subr.mxu0 0.0
      %333 = vmatpush1.msra.mxu0 0.0
      %334 = vmatprep.subr.mxu0 0.0
      %335 = vmatpush1.msra.mxu0 0.0
      %336 = vmatprep.subr.mxu0 0.0
      %337 = vmatpush1.msra.mxu0 0.0
      %338 = vmatprep.subr.mxu0 0.0
      %339 = vmatpush1.msra.mxu0 0.0
      %340 = vmatprep.subr.mxu0 0.0
      %341 = vmatpush1.msra.mxu0 0.0
      %342 = vmatprep.subr.mxu0 0.0
      %343 = vmatpush1.msra.mxu0 0.0
      %344 = vmatprep.subr.mxu0 0.0
      %345 = vmatpush1.msra.mxu0 0.0
      %346 = vmatprep.subr.mxu0 0.0
      %347 = vmatpush1.msra.mxu0 0.0
      %348 = vmatprep.subr.mxu0 0.0
      %349 = vmatpush1.msra.mxu0 0.0
      %350 = vmatprep.subr.mxu0 0.0
      %351 = vmatpush1.msra.mxu0 0.0
      %352 = vmatprep.subr.mxu0 0.0
      %353 = vmatpush1.msra.mxu0 0.0
      %354 = vmatprep.subr.mxu0 0.0
      %355 = vmatpush1.msra.mxu0 0.0
      %356 = vmatprep.subr.mxu0 0.0
      %357 = vmatpush1.msra.mxu0 0.0
      %358 = vmatprep.subr.mxu0 0.0
      %359 = vmatpush1.msra.mxu0 %v326
      %360 = vmatprep.subr.mxu0 0.0
      %361 = vmatpush2.msra.mxu0 0.0
      %362 = vmatprep.subr.mxu0 0.0
      %363 = vmatpush2.msra.mxu0 0.0
      %364 = vmatprep.subr.mxu0 0.0
      %365 = vmatpush2.msra.mxu0 0.0
      %366 = vmatprep.subr.mxu0 0.0
      %367 = vmatpush2.msra.mxu0 0.0
      %368 = vmatprep.subr.mxu0 0.0
      %369 = vmatpush2.msra.mxu0 0.0
      %370 = vmatprep.subr.mxu0 0.0
      %371 = vmatpush2.msra.mxu0 0.0
      %372 = vmatprep.subr.mxu0 0.0
      %373 = vmatpush2.msra.mxu0 0.0
      %374 = vmatprep.subr.mxu0 0.0
      %375 = vmatpush2.msra.mxu0 0.0
      %376 = vmatprep.subr.mxu0 0.0
      %377 = vmatpush2.msra.mxu0 0.0
      %378 = vmatprep.subr.mxu0 0.0
      %379 = vmatpush2.msra.mxu0 0.0
      %380 = vmatprep.subr.mxu0 0.0
      %381 = vmatpush2.msra.mxu0 0.0
      %382 = vmatprep.subr.mxu0 0.0
      %383 = vmatpush2.msra.mxu0 0.0
      %384 = vmatprep.subr.mxu0 0.0
      %385 = vmatpush2.msra.mxu0 0.0
      %386 = vmatprep.subr.mxu0 0.0
      %387 = vmatpush2.msra.mxu0 0.0
      %388 = vmatprep.subr.mxu0 0.0
      %389 = vmatpush2.msra.mxu0 0.0
      %390 = vmatprep.subr.mxu0 0.0
      %391 = vmatpush2.msra.mxu0 0.0
      %392 = vmatprep.mubr.f32.mxu0 0.0
      %393 = vmatmul.mubr.f32.gmra.mxu0 %v322
      %v394 = vpop.f32.mrf.mxu0
      %v395 = vadd.f32 0.0, %v394
      %v396 = vpop.f32.mrf.mxu0
      %397 = vdwg.mxu0
      %v398 = vsub.f32 0.0, %v395
      %v399 = vmul.f32 %v398, 1.442695
      %v400 = vpow.pop %v399
      %v401 = vadd.f32 %v400, 1.0
      %v402 = vrcp.pop %v401
      %v403 = vmul.f32 1.0, %v402
      %v404 = vlaneseq
      %v405 = vshrl.u32 %v404, 7
      %v406 = vsub.s32 0, %v405
      %v407 = vrot.slane %v403, %v406
      %409 = vbcast.lane.b32.xlu0 %v407, 256
      %v410 = vpop.permute.xlu0 %409
      %s412 = sor.u32 256, 8
      %413 = vbcast.lane.b32.xlu0 %v407, %s412
      %v414 = vpop.permute.xlu0 %413
      %s416 = sor.u32 256, 16
      %417 = vbcast.lane.b32.xlu0 %v407, %s416
      %v418 = vpop.permute.xlu0 %417
      %s420 = sor.u32 256, 24
      %421 = vbcast.lane.b32.xlu0 %v407, %s420
      %v422 = vpop.permute.xlu0 %421
      %v423 = vmul.f32 %v171, %v410
      %v424 = vmul.f32 %v172, %v410
      %v425 = vmul.f32 %v173, %v414
      %v426 = vmul.f32 %v174, %v414
      %v427 = vmul.f32 %v175, %v418
      %v428 = vmul.f32 %v176, %v418
      %v429 = vmul.f32 %v177, %v422
      %v430 = vmul.f32 %v178, %v422
      %431 = vst [vmem:[%s170] sm:$0xff] %v423
      %432 = vst [vmem:[%s170 + $0x8] sm:$0xff] %v424
      %433 = vst [vmem:[%s170 + $0x10] sm:$0xff] %v425
      %434 = vst [vmem:[%s170 + $0x18] sm:$0xff] %v426
      %435 = vst [vmem:[%s170 + $0x20] sm:$0xff] %v427
      %436 = vst [vmem:[%s170 + $0x28] sm:$0xff] %v428
      %437 = vst [vmem:[%s170 + $0x30] sm:$0xff] %v429
      %438 = vst [vmem:[%s170 + $0x38] sm:$0xff] %v430
      %p439 = scmp.lt.s32.totalorder %s14, 1
      %s440 = scalar_select %p439, %s14, 1
      %s441 = smul.addr %s440, 8
      %s442 = smul.addr %s441, 8
      %s443 = scalar_lea.vmem %s3, %s442
      // Predicated region
      $region33: #{cse_forward.1} parent=31 // pred_check
        %p444 = pneg %p100
      $region34: #{cse_forward.1} parent=31 // pred_check_branch
        %446 = sbr.rel (%p444) target = $region36
      $region35: #{cse_forward.1} parent=31 // pred_region
        _
      $region36: #{cse_forward.1} parent=31 // pred_fallthru
        _
    $region32: #{cse_forward.1} parent=5 // pred_fallthru
      _
    %p447 = scmp.le.s32.totalorder 2, %s9
    // Predicated region
    $region37: #{cse_forward.1} parent=5 // pred_check
      %p448 = pneg %p447
    $region38: #{cse_forward.1} parent=5 // pred_check_branch
      %450 = sbr.rel (%p448) target = $region40
    $region39: #{cse_forward.1} parent=5 // pred_region
      %s451 = ssub.s32 %s9, 2
      // Predicated region
      $region41: #{cse_forward.1} parent=39 // pred_check
        %p452 = pneg %p106
      $region42: #{cse_forward.1} parent=39 // pred_check_branch
        %454 = sbr.rel (%p452) target = $region44
      $region43: #{cse_forward.1} parent=39 // pred_region
        %p455 = scmp.lt.s32.totalorder %s15, 1
        %s456 = scalar_select %p455, %s15, 1
        %s457 = smul.addr %s456, 8
        %s458 = smul.addr %s457, 8
        %s459 = scalar_lea.vmem %s3, %s458
      $region44: #{cse_forward.1} parent=39 // pred_fallthru
        _
    $region40: #{cse_forward.1} parent=5 // pred_fallthru
      _
  $region6: #{cse_forward.1} parent=0 // loop_footer
    %s13 = sadd.s32 1, %s9
  $region7: #{cse_forward.1} parent=0 // loop_footer_branch
    %8 = sbr.rel target = $region3
  $region8: #{cse_forward.1} parent=0 // loop_exit
    _

</llo_original>
